<compile_context>
chip_gen: v5e
topology: v5e:2x2
jax: 0.10.0
libtpu: 0.0.40
codegen_flags: <defaults>
</compile_context>

<pallas_src>
import functools

import jax
import jax.numpy as jnp
from jax import lax
from jax.experimental import pallas as pl
from jax.experimental.pallas import tpu as pltpu


def pinn_kernel(x_ref, w1_ref, b1_ref, w2_ref, b2_ref,
                w3_ref, b3_ref, w4_ref, b4_ref, o_ref,
                *, mxu_dtype, tanh_dtype):
    # x_ref: (TB, 4) native layout.  weights: (out, in).  biases: (out, 1) f32.
    # o_ref: (1, TB) lane-dense.
    x = x_ref[...].astype(mxu_dtype)

    # Layer 1: contract on x's LAST axis -> (16, TB).  Equivalent to w1 @ x.T,
    # so no wrapper-side transpose / extra HBM pass over x is needed.
    h = lax.dot_general(w1_ref[...], x, (((1,), (1,)), ((), ())),
                        preferred_element_type=jnp.float32) + b1_ref[...]
    h = jnp.tanh(h.astype(tanh_dtype)).astype(mxu_dtype)

    h = jnp.dot(w2_ref[...], h,
                preferred_element_type=jnp.float32) + b2_ref[...]
    h = jnp.tanh(h.astype(tanh_dtype)).astype(mxu_dtype)

    h = jnp.dot(w3_ref[...], h,
                preferred_element_type=jnp.float32) + b3_ref[...]
    h = jnp.tanh(h.astype(tanh_dtype)).astype(mxu_dtype)

    # TODO(synk): if a bundle dump shows the degenerate (1,16)@(16,TB) matmul
    # competing with the EUP, replace it with a VPU multiply + sublane reduce.
    o_ref[...] = (jnp.dot(w4_ref[...], h, preferred_element_type=jnp.float32)
                  + b4_ref[...]).astype(o_ref.dtype)


def _eup_has_bf16():
    """True on chips with a bf16-capable EUP (v6e / v7x)."""
    try:
        kind = jax.devices()[0].device_kind.lower()
        return not any(v in kind for v in ("v2", "v3", "v4", "v5"))
    except Exception:  # pragma: no cover - be conservative
        return False


def _choose_tile(batch, block_b, max_tb=32768):
    """Lane tile: multiple of 128, <= 32K, and >= 2 grid steps when possible
    so the parallel batch axis can use both TensorCores on v7x."""
    block_b = max(128, (block_b // 128) * 128)
    b128 = pl.cdiv(batch, 128) * 128
    tb = min(block_b, max_tb, b128)
    if b128 >= 256 and tb >= b128:          # whole batch in one tile -> split
        tb = pl.cdiv(pl.cdiv(b128, 2), 128) * 128
    return tb


def pinn_forward(x, params, *, block_b=32768, use_bf16=True, bf16_tanh=None):
    """x: (B, 4) f32.  params: PyTorch-layout weights (out, in), biases (out, 1).
    Returns (B, 1) f32."""
    B, in_size = x.shape
    out_size = params["w4"].shape[0]

    if bf16_tanh is None:
        bf16_tanh = use_bf16 and _eup_has_bf16()
    mxu_dtype = jnp.bfloat16 if use_bf16 else jnp.float32
    tanh_dtype = jnp.bfloat16 if (use_bf16 and bf16_tanh) else jnp.float32

    TB = _choose_tile(B, block_b)
    B_pad = pl.cdiv(B, TB) * TB
    if B_pad != B:
        x = jnp.pad(x, ((0, B_pad - B), (0, 0)))

    # Cast MXU weight operands once in the wrapper; biases stay f32 (added to
    # the f32 accumulator).
    w1 = params["w1"].astype(mxu_dtype)
    w2 = params["w2"].astype(mxu_dtype)
    w3 = params["w3"].astype(mxu_dtype)
    w4 = params["w4"].astype(mxu_dtype)

    grid = (B_pad // TB,)

    def moving_rows(i):   # x tile: batch along sublanes
        return (i, 0)

    def moving_lanes(i):  # out tile: batch along lanes
        return (0, i)

    def const(i):
        return (0, 0)

    kernel = functools.partial(pinn_kernel,
                               mxu_dtype=mxu_dtype, tanh_dtype=tanh_dtype)

    out_t = pl.pallas_call(
        kernel,
        out_shape=jax.ShapeDtypeStruct((out_size, B_pad), jnp.float32),
        grid=grid,
        in_specs=[
            pl.BlockSpec((TB, in_size), moving_rows),   # x: native layout
            pl.BlockSpec(w1.shape, const),              # weights/biases stay
            pl.BlockSpec(params["b1"].shape, const),    # VMEM-resident
            pl.BlockSpec(w2.shape, const),
            pl.BlockSpec(params["b2"].shape, const),
            pl.BlockSpec(w3.shape, const),
            pl.BlockSpec(params["b3"].shape, const),
            pl.BlockSpec(w4.shape, const),
            pl.BlockSpec(params["b4"].shape, const),
        ],
        out_specs=pl.BlockSpec((out_size, TB), moving_lanes),
        compiler_params=pltpu.CompilerParams(
            dimension_semantics=("parallel",),
            vmem_limit_bytes=48 * 1024 * 1024),
    )(x,
      w1, params["b1"],
      w2, params["b2"],
      w3, params["b3"],
      w4, params["b4"])

    return out_t[:, :B].T                               # (B, out) -- free (1,B) T


def init_params(key, input_size=4, hidden_size=16, output_size=1):
    """PyTorch nn.Linear default init: U(-1/sqrt(fan_in), 1/sqrt(fan_in)) for
    weight (out, in) and bias (out, 1)."""
    sizes = [(hidden_size, input_size),
             (hidden_size, hidden_size),
             (hidden_size, hidden_size),
             (output_size, hidden_size)]
    params = {}
    keys = jax.random.split(key, 2 * len(sizes))
    for i, (fan_out, fan_in) in enumerate(sizes):
        bound = 1.0 / (fan_in ** 0.5)
        params[f"w{i + 1}"] = jax.random.uniform(
            keys[2 * i], (fan_out, fan_in), jnp.float32, -bound, bound)
        params[f"b{i + 1}"] = jax.random.uniform(
            keys[2 * i + 1], (fan_out, 1), jnp.float32, -bound, bound)
    return params


def pinn_forward_ref(x, params):
    """Pure-JAX reference (x: (B, 4) -> (B, 1))."""
    h = jnp.tanh(x @ params["w1"].T + params["b1"].T)
    h = jnp.tanh(h @ params["w2"].T + params["b2"].T)
    h = jnp.tanh(h @ params["w3"].T + params["b3"].T)
    return h @ params["w4"].T + params["b4"].T


if __name__ == "__main__":
    key = jax.random.PRNGKey(0)
    pkey, xkey, xkey2 = jax.random.split(key, 3)
    params = init_params(pkey, input_size=4, hidden_size=16, output_size=1)

    # inputs: (batch=8, features=4) -> [time_step, voltage, current, temperature]
    x = jax.random.uniform(xkey, (8, 4), jnp.float32, 0.0, 1.0)
    ref = pinn_forward_ref(x, params)

    # Exact f32 path: bit-safe check against the pure-JAX reference.
    out_f32 = pinn_forward(x, params, use_bf16=False)
    jax.block_until_ready(out_f32)
    assert out_f32.shape == (8, 1)
    assert jnp.allclose(out_f32, ref, atol=1e-5, rtol=1e-5), "f32 mismatch"

    # Fast path (bf16 MXU operands, f32 accumulation, bf16 tanh on v6e/v7x):
    # looser tolerance since operand precision changes.
    out_fast = pinn_forward(x, params, use_bf16=True)
    jax.block_until_ready(out_fast)
    assert jnp.allclose(out_fast, ref, atol=2e-2, rtol=2e-2), "bf16 mismatch"

    # Ragged batch exercising padding and a >= 2-step grid (megacore split).
    x2 = jax.random.uniform(xkey2, (300, 4), jnp.float32, 0.0, 1.0)
    out2 = pinn_forward(x2, params, use_bf16=False)
    jax.block_until_ready(out2)
    assert out2.shape == (300, 1)
    assert jnp.allclose(out2, pinn_forward_ref(x2, params),
                        atol=1e-5, rtol=1e-5), "padded-batch mismatch"

    print("KERNEL_OK")
</pallas_src>

<mosaic_0001>
module attributes {stable_mosaic.version = 11 : i64} {
  func.func @pinn_kernel(%arg0: i32, %arg1: memref<128x4xf32, #tpu.memory_space<vmem>>, %arg2: memref<16x4xf32, #tpu.memory_space<vmem>>, %arg3: memref<16x1xf32, #tpu.memory_space<vmem>>, %arg4: memref<16x16xf32, #tpu.memory_space<vmem>>, %arg5: memref<16x1xf32, #tpu.memory_space<vmem>>, %arg6: memref<16x16xf32, #tpu.memory_space<vmem>>, %arg7: memref<16x1xf32, #tpu.memory_space<vmem>>, %arg8: memref<1x16xf32, #tpu.memory_space<vmem>>, %arg9: memref<1x1xf32, #tpu.memory_space<vmem>>, %arg10: memref<1x128xf32, #tpu.memory_space<vmem>>) attributes {dimension_semantics = [#tpu.dimension_semantics<parallel>], iteration_bounds = array<i64: 1>, scalar_prefetch = 0 : i64, scratch_operands = 0 : i64, tpu.core_type = #tpu.core_type<tc>, window_params = [{transform_indices = @transform_0, window_bounds = array<i64: 128, 4>}, {pipeline_mode = #tpu.pipeline_mode<synchronous>, transform_indices = @transform_1, window_bounds = array<i64: 16, 4>}, {pipeline_mode = #tpu.pipeline_mode<synchronous>, transform_indices = @transform_2, window_bounds = array<i64: 16, 1>}, {pipeline_mode = #tpu.pipeline_mode<synchronous>, transform_indices = @transform_3, window_bounds = array<i64: 16, 16>}, {pipeline_mode = #tpu.pipeline_mode<synchronous>, transform_indices = @transform_4, window_bounds = array<i64: 16, 1>}, {pipeline_mode = #tpu.pipeline_mode<synchronous>, transform_indices = @transform_5, window_bounds = array<i64: 16, 16>}, {pipeline_mode = #tpu.pipeline_mode<synchronous>, transform_indices = @transform_6, window_bounds = array<i64: 16, 1>}, {pipeline_mode = #tpu.pipeline_mode<synchronous>, transform_indices = @transform_7, window_bounds = array<i64: 1, 16>}, {pipeline_mode = #tpu.pipeline_mode<synchronous>, transform_indices = @transform_8, window_bounds = array<i64: 1, 1>}, {transform_indices = @transform_9, window_bounds = array<i64: 1, 128>}]} {
    %c0 = arith.constant 0 : index
    %c0_0 = arith.constant 0 : index
    %0 = vector.load %arg1[%c0, %c0_0] : memref<128x4xf32, #tpu.memory_space<vmem>>, vector<128x4xf32>
    %c0_1 = arith.constant 0 : index
    %c0_2 = arith.constant 0 : index
    %1 = vector.load %arg2[%c0_1, %c0_2] : memref<16x4xf32, #tpu.memory_space<vmem>>, vector<16x4xf32>
    %cst = arith.constant dense<0.000000e+00> : vector<16x128xf32>
    %2 = tpu.matmul %1, %0, %cst {dimension_numbers = #tpu.dot_dimension_numbers<[1], [1], [0], [0], [0, 0, 1, 0], [], []>} : vector<16x4xf32>, vector<128x4xf32>, vector<16x128xf32> -> vector<16x128xf32>
    %c0_3 = arith.constant 0 : index
    %c0_4 = arith.constant 0 : index
    %3 = vector.load %arg3[%c0_3, %c0_4] : memref<16x1xf32, #tpu.memory_space<vmem>>, vector<16x1xf32>
    %4 = vector.broadcast %3 : vector<16x1xf32> to vector<16x128xf32>
    %5 = arith.addf %2, %4 : vector<16x128xf32>
    %6 = math.tanh %5 : vector<16x128xf32>
    %c0_5 = arith.constant 0 : index
    %c0_6 = arith.constant 0 : index
    %7 = vector.load %arg4[%c0_5, %c0_6] : memref<16x16xf32, #tpu.memory_space<vmem>>, vector<16x16xf32>
    %cst_7 = arith.constant dense<0.000000e+00> : vector<16x128xf32>
    %8 = tpu.matmul %7, %6, %cst_7 {dimension_numbers = #tpu.dot_dimension_numbers<[1], [0], [0], [1], [0, 0, 1, 1], [], []>} : vector<16x16xf32>, vector<16x128xf32>, vector<16x128xf32> -> vector<16x128xf32>
    %c0_8 = arith.constant 0 : index
    %c0_9 = arith.constant 0 : index
    %9 = vector.load %arg5[%c0_8, %c0_9] : memref<16x1xf32, #tpu.memory_space<vmem>>, vector<16x1xf32>
    %10 = vector.broadcast %9 : vector<16x1xf32> to vector<16x128xf32>
    %11 = arith.addf %8, %10 : vector<16x128xf32>
    %12 = math.tanh %11 : vector<16x128xf32>
    %c0_10 = arith.constant 0 : index
    %c0_11 = arith.constant 0 : index
    %13 = vector.load %arg6[%c0_10, %c0_11] : memref<16x16xf32, #tpu.memory_space<vmem>>, vector<16x16xf32>
    %cst_12 = arith.constant dense<0.000000e+00> : vector<16x128xf32>
    %14 = tpu.matmul %13, %12, %cst_12 {dimension_numbers = #tpu.dot_dimension_numbers<[1], [0], [0], [1], [0, 0, 1, 1], [], []>} : vector<16x16xf32>, vector<16x128xf32>, vector<16x128xf32> -> vector<16x128xf32>
    %c0_13 = arith.constant 0 : index
    %c0_14 = arith.constant 0 : index
    %15 = vector.load %arg7[%c0_13, %c0_14] : memref<16x1xf32, #tpu.memory_space<vmem>>, vector<16x1xf32>
    %16 = vector.broadcast %15 : vector<16x1xf32> to vector<16x128xf32>
    %17 = arith.addf %14, %16 : vector<16x128xf32>
    %18 = math.tanh %17 : vector<16x128xf32>
    %c0_15 = arith.constant 0 : index
    %c0_16 = arith.constant 0 : index
    %19 = vector.load %arg8[%c0_15, %c0_16] : memref<1x16xf32, #tpu.memory_space<vmem>>, vector<1x16xf32>
    %cst_17 = arith.constant dense<0.000000e+00> : vector<1x128xf32>
    %20 = tpu.matmul %19, %18, %cst_17 {dimension_numbers = #tpu.dot_dimension_numbers<[1], [0], [0], [1], [0, 0, 1, 1], [], []>} : vector<1x16xf32>, vector<16x128xf32>, vector<1x128xf32> -> vector<1x128xf32>
    %c0_18 = arith.constant 0 : index
    %c0_19 = arith.constant 0 : index
    %21 = vector.load %arg9[%c0_18, %c0_19] : memref<1x1xf32, #tpu.memory_space<vmem>>, vector<1x1xf32>
    %22 = vector.broadcast %21 : vector<1x1xf32> to vector<1x128xf32>
    %23 = arith.addf %20, %22 : vector<1x128xf32>
    %c0_20 = arith.constant 0 : index
    %c0_21 = arith.constant 0 : index
    %24 = vector.load %arg10[%c0_20, %c0_21] : memref<1x128xf32, #tpu.memory_space<vmem>>, vector<1x128xf32>
    tpu.vector_store %arg10[%c0_20, %c0_21], %23 {strides = array<i32>} : memref<1x128xf32, #tpu.memory_space<vmem>>, vector<1x128xf32>,
    return
  }
  func.func @transform_0(%arg0: i32) -> (i32, i32) {
    %c0_i32 = arith.constant 0 : i32
    %c0_i32_0 = arith.constant 0 : i32
    return %arg0, %c0_i32 : i32, i32
  }
  func.func @transform_1(%arg0: i32) -> (i32, i32) {
    %c0_i32 = arith.constant 0 : i32
    %c0_i32_0 = arith.constant 0 : i32
    %c0_i32_1 = arith.constant 0 : i32
    return %c0_i32, %c0_i32_0 : i32, i32
  }
  func.func @transform_2(%arg0: i32) -> (i32, i32) {
    %c0_i32 = arith.constant 0 : i32
    %c0_i32_0 = arith.constant 0 : i32
    %c0_i32_1 = arith.constant 0 : i32
    return %c0_i32, %c0_i32_0 : i32, i32
  }
  func.func @transform_3(%arg0: i32) -> (i32, i32) {
    %c0_i32 = arith.constant 0 : i32
    %c0_i32_0 = arith.constant 0 : i32
    %c0_i32_1 = arith.constant 0 : i32
    return %c0_i32, %c0_i32_0 : i32, i32
  }
  func.func @transform_4(%arg0: i32) -> (i32, i32) {
    %c0_i32 = arith.constant 0 : i32
    %c0_i32_0 = arith.constant 0 : i32
    %c0_i32_1 = arith.constant 0 : i32
    return %c0_i32, %c0_i32_0 : i32, i32
  }
  func.func @transform_5(%arg0: i32) -> (i32, i32) {
    %c0_i32 = arith.constant 0 : i32
    %c0_i32_0 = arith.constant 0 : i32
    %c0_i32_1 = arith.constant 0 : i32
    return %c0_i32, %c0_i32_0 : i32, i32
  }
  func.func @transform_6(%arg0: i32) -> (i32, i32) {
    %c0_i32 = arith.constant 0 : i32
    %c0_i32_0 = arith.constant 0 : i32
    %c0_i32_1 = arith.constant 0 : i32
    return %c0_i32, %c0_i32_0 : i32, i32
  }
  func.func @transform_7(%arg0: i32) -> (i32, i32) {
    %c0_i32 = arith.constant 0 : i32
    %c0_i32_0 = arith.constant 0 : i32
    %c0_i32_1 = arith.constant 0 : i32
    return %c0_i32, %c0_i32_0 : i32, i32
  }
  func.func @transform_8(%arg0: i32) -> (i32, i32) {
    %c0_i32 = arith.constant 0 : i32
    %c0_i32_0 = arith.constant 0 : i32
    %c0_i32_1 = arith.constant 0 : i32
    return %c0_i32, %c0_i32_0 : i32, i32
  }
  func.func @transform_9(%arg0: i32) -> (i32, i32) {
    %c0_i32 = arith.constant 0 : i32
    %c0_i32_0 = arith.constant 0 : i32
    return %c0_i32, %arg0 : i32, i32
  }
}

</mosaic_0001>

<llo_original>
// kernel: tpu_custom_call.1
$region0: #{tpu_custom_call.1}
  #allocation0 [shape = 'u32[]', space=smem, size = 0x4, offset = 0x4, fixed_abs, tag = 'smem constant byte address 0x4 - core index']
  #allocation1 [shape = 'u32[72,128]{1,0:T(1,128)}', space=vmem, size = 0x9000, scoped, tag = 'internal scratch']
  #allocation2 [shape = 'f32[1,1]{1,0:T(1,128)S(1)}', space=vmem, size = 0x200, scoped, tag = 'scoped memory for tpu_custom_call.1']
  %s0 = inlined_call_operand.vmem [shape: f32[128,4], index: 0, kind: input, shape index: {}]
  %s1 = inlined_call_operand.vmem [shape: f32[16,4], index: 1, kind: input, shape index: {}]
  %s2 = inlined_call_operand.vmem [shape: f32[16,1], index: 2, kind: input, shape index: {}]
  %s3 = inlined_call_operand.vmem [shape: f32[16,16], index: 3, kind: input, shape index: {}]
  %s4 = inlined_call_operand.vmem [shape: f32[16,1], index: 4, kind: input, shape index: {}]
  %s5 = inlined_call_operand.vmem [shape: f32[16,16], index: 5, kind: input, shape index: {}]
  %s6 = inlined_call_operand.vmem [shape: f32[16,1], index: 6, kind: input, shape index: {}]
  %s7 = inlined_call_operand.vmem [shape: f32[1,16], index: 7, kind: input, shape index: {}]
  %s8 = inlined_call_operand.<no memory space> [shape: f32[1,1], index: 8, kind: input, shape index: {}]
  %s9 = inlined_call_operand.hbm [shape: f32[1,128], index: 9, kind: output, shape index: {}]
  %s10 = sld [smem:[#allocation0]]
  $region46: #{tpu_custom_call.1} parent=0
    _
  %s12 = ssub.s32 1, %s10
  %s13 = scalar_select 0, %s12, %s10
  %v14 = vstv %s8
  %15 = vst [vmem:[#allocation2] sm:$0x1] %v14
  $region1: #{tpu_custom_call.1} parent=0
    #allocation3 [shape = 'u8[512]{0}', space=vmem, size = 0x400, scoped, tag = 'output window, operand 0, single buffered']
    #allocation4 [shape = 's32[1]{0}', space=sflag, size = 0x4, scoped, tag = 'scoped memory for tpu_custom_call.1']
    %16 = vsyncpa [#allocation4], 0
    // Predicated region
    $region2: #{tpu_custom_call.1} parent=1 // pred_check
      _
    $region3: #{tpu_custom_call.1} parent=1 // pred_check_branch
      %18 = sbr.rel (0) target = $region5
    $region4: #{tpu_custom_call.1} parent=1 // pred_region
      _
    $region5: #{tpu_custom_call.1} parent=1 // pred_fallthru
      _
    // Predicated region
    $region6: #{tpu_custom_call.1} parent=1 // pred_check
      _
    $region7: #{tpu_custom_call.1} parent=1 // pred_check_branch
      %20 = sbr.rel (0) target = $region9
    $region8: #{tpu_custom_call.1} parent=1 // pred_region
      _
    $region9: #{tpu_custom_call.1} parent=1 // pred_fallthru
      _
    // Predicated region
    $region10: #{tpu_custom_call.1} parent=1 // pred_check
      _
    $region11: #{tpu_custom_call.1} parent=1 // pred_check_branch
      %22 = sbr.rel (0) target = $region13
    $region12: #{tpu_custom_call.1} parent=1 // pred_region
      _
    $region13: #{tpu_custom_call.1} parent=1 // pred_fallthru
      _
    // Predicated region
    $region14: #{tpu_custom_call.1} parent=1 // pred_check
      _
    $region15: #{tpu_custom_call.1} parent=1 // pred_check_branch
      %24 = sbr.rel (0) target = $region17
    $region16: #{tpu_custom_call.1} parent=1 // pred_region
      _
    $region17: #{tpu_custom_call.1} parent=1 // pred_fallthru
      _
    // Predicated region
    $region18: #{tpu_custom_call.1} parent=1 // pred_check
      _
    $region19: #{tpu_custom_call.1} parent=1 // pred_check_branch
      %26 = sbr.rel (0) target = $region21
    $region20: #{tpu_custom_call.1} parent=1 // pred_region
      _
    $region21: #{tpu_custom_call.1} parent=1 // pred_fallthru
      _
    // Predicated region
    $region22: #{tpu_custom_call.1} parent=1 // pred_check
      _
    $region23: #{tpu_custom_call.1} parent=1 // pred_check_branch
      %28 = sbr.rel (0) target = $region25
    $region24: #{tpu_custom_call.1} parent=1 // pred_region
      _
    $region25: #{tpu_custom_call.1} parent=1 // pred_fallthru
      _
    // Predicated region
    $region26: #{tpu_custom_call.1} parent=1 // pred_check
      _
    $region27: #{tpu_custom_call.1} parent=1 // pred_check_branch
      %30 = sbr.rel (0) target = $region29
    $region28: #{tpu_custom_call.1} parent=1 // pred_region
      _
    $region29: #{tpu_custom_call.1} parent=1 // pred_fallthru
      _
    // Predicated region
    $region30: #{tpu_custom_call.1} parent=1 // pred_check
      _
    $region31: #{tpu_custom_call.1} parent=1 // pred_check_branch
      %32 = sbr.rel (0) target = $region33
    $region32: #{tpu_custom_call.1} parent=1 // pred_region
      _
    $region33: #{tpu_custom_call.1} parent=1 // pred_fallthru
      _
    // Predicated region
    $region34: #{tpu_custom_call.1} parent=1 // pred_check
      _
    $region35: #{tpu_custom_call.1} parent=1 // pred_check_branch
      %34 = sbr.rel (0) target = $region37
    $region36: #{tpu_custom_call.1} parent=1 // pred_region
      _
    $region37: #{tpu_custom_call.1} parent=1 // pred_fallthru
      _
    %v35 = vld [vmem:[%s0] sm:$0xff]
    %v36 = vld [vmem:[%s0 + $0x8] sm:$0xff]
    %v37 = vld [vmem:[%s0 + $0x10] sm:$0xff]
    %v38 = vld [vmem:[%s0 + $0x18] sm:$0xff]
    %v39 = vld [vmem:[%s0 + $0x20] sm:$0xff]
    %v40 = vld [vmem:[%s0 + $0x28] sm:$0xff]
    %v41 = vld [vmem:[%s0 + $0x30] sm:$0xff]
    %v42 = vld [vmem:[%s0 + $0x38] sm:$0xff]
    %v43 = vld [vmem:[%s0 + $0x40] sm:$0xff]
    %v44 = vld [vmem:[%s0 + $0x48] sm:$0xff]
    %v45 = vld [vmem:[%s0 + $0x50] sm:$0xff]
    %v46 = vld [vmem:[%s0 + $0x58] sm:$0xff]
    %v47 = vld [vmem:[%s0 + $0x60] sm:$0xff]
    %v48 = vld [vmem:[%s0 + $0x68] sm:$0xff]
    %v49 = vld [vmem:[%s0 + $0x70] sm:$0xff]
    %v50 = vld [vmem:[%s0 + $0x78] sm:$0xff]
    %v51 = vld [vmem:[%s1] sm:$0xff]
    %v52 = vld [vmem:[%s1 + $0x8] sm:$0xff]
    %v53 = vld [vmem:[%s2] sm:$0xff]
    %v54 = vld [vmem:[%s2 + $0x8] sm:$0xff]
    %56 = vset.pattern.permute.xlu0 0
    %57 = vperm.xlu0 %56, %v53
    %v58 = vpop.permute.xlu0 %57
    %61 = vset.pattern.permute.xlu0 0
    %62 = vperm.xlu0 %61, %v54
    %v63 = vpop.permute.xlu0 %62
    %vm65 = vcmask 31744
    %v67 = vsel %vm65, %v51, 0
    %v70 = vsel %vm65, %v52, 0
    %v73 = vsel %vm65, %v35, 0
    %v76 = vsel %vm65, %v36, 0
    %v79 = vsel %vm65, %v37, 0
    %v82 = vsel %vm65, %v38, 0
    %v85 = vsel %vm65, %v39, 0
    %v88 = vsel %vm65, %v40, 0
    %v91 = vsel %vm65, %v41, 0
    %v94 = vsel %vm65, %v42, 0
    %v97 = vsel %vm65, %v43, 0
    %v100 = vsel %vm65, %v44, 0
    %v103 = vsel %vm65, %v45, 0
    %v106 = vsel %vm65, %v46, 0
    %v109 = vsel %vm65, %v47, 0
    %v112 = vsel %vm65, %v48, 0
    %v115 = vsel %vm65, %v49, 0
    %v118 = vsel %vm65, %v50, 0
    %120 = vmatpush.xpose.msra.mxu0 %v118
    %121 = vmatpush.xpose.msra.mxu0 %v115
    %122 = vmatpush.xpose.msra.mxu0 %v112
    %123 = vmatpush.xpose.msra.mxu0 %v109
    %124 = vmatpush.xpose.msra.mxu0 %v106
    %125 = vmatpush.xpose.msra.mxu0 %v103
    %126 = vmatpush.xpose.msra.mxu0 %v100
    %127 = vmatpush.xpose.msra.mxu0 %v97
    %128 = vmatpush.xpose.msra.mxu0 %v94
    %129 = vmatpush.xpose.msra.mxu0 %v91
    %130 = vmatpush.xpose.msra.mxu0 %v88
    %131 = vmatpush.xpose.msra.mxu0 %v85
    %132 = vmatpush.xpose.msra.mxu0 %v82
    %133 = vmatpush.xpose.msra.mxu0 %v79
    %134 = vmatpush.xpose.msra.mxu0 %v76
    %135 = vmatpush.xpose.msra.mxu0 %v73
    %136 = vmatmul.f32.gmra.mxu0 %v67
    %v137 = vpop.f32.mrf.mxu0
    %v138 = vadd.f32 %v58, %v137
    %139 = vmatmul.f32.gmra.mxu0 %v70
    %v140 = vpop.f32.mrf.mxu0
    %v141 = vadd.f32 %v63, %v140
    %142 = vdwg.mxu0
    %v143 = vtanh.pop %v138
    %v144 = vtanh.pop %v141
    %v145 = vld [vmem:[%s3] sm:$0xff]
    %v146 = vld [vmem:[%s3 + $0x8] sm:$0xff]
    %v147 = vld [vmem:[%s4] sm:$0xff]
    %v148 = vld [vmem:[%s4 + $0x8] sm:$0xff]
    %150 = vset.pattern.permute.xlu0 0
    %151 = vperm.xlu0 %150, %v147
    %v152 = vpop.permute.xlu0 %151
    %155 = vset.pattern.permute.xlu0 0
    %156 = vperm.xlu0 %155, %v148
    %v157 = vpop.permute.xlu0 %156
    %vm159 = vcmask 130048
    %v161 = vsel %vm159, %v145, 0
    %v164 = vsel %vm159, %v146, 0
    %166 = vmatpush.msra.mxu0 0.0
    %167 = vmatpush.msra.mxu0 0.0
    %168 = vmatpush.msra.mxu0 0.0
    %169 = vmatpush.msra.mxu0 0.0
    %170 = vmatpush.msra.mxu0 0.0
    %171 = vmatpush.msra.mxu0 0.0
    %172 = vmatpush.msra.mxu0 0.0
    %173 = vmatpush.msra.mxu0 0.0
    %174 = vmatpush.msra.mxu0 0.0
    %175 = vmatpush.msra.mxu0 0.0
    %176 = vmatpush.msra.mxu0 0.0
    %177 = vmatpush.msra.mxu0 0.0
    %178 = vmatpush.msra.mxu0 0.0
    %179 = vmatpush.msra.mxu0 0.0
    %180 = vmatpush.msra.mxu0 %v144
    %181 = vmatpush.msra.mxu0 %v143
    %182 = vmatmul.f32.gmra.mxu0 %v161
    %v183 = vpop.f32.mrf.mxu0
    %v184 = vadd.f32 %v152, %v183
    %185 = vmatmul.f32.gmra.mxu0 %v164
    %v186 = vpop.f32.mrf.mxu0
    %v187 = vadd.f32 %v157, %v186
    %188 = vdwg.mxu0
    %v189 = vtanh.pop %v184
    %v190 = vtanh.pop %v187
    %v191 = vld [vmem:[%s5] sm:$0xff]
    %v192 = vld [vmem:[%s5 + $0x8] sm:$0xff]
    %v193 = vld [vmem:[%s6] sm:$0xff]
    %v194 = vld [vmem:[%s6 + $0x8] sm:$0xff]
    %196 = vset.pattern.permute.xlu0 0
    %197 = vperm.xlu0 %196, %v193
    %v198 = vpop.permute.xlu0 %197
    %201 = vset.pattern.permute.xlu0 0
    %202 = vperm.xlu0 %201, %v194
    %v203 = vpop.permute.xlu0 %202
    %v206 = vsel %vm159, %v191, 0
    %v209 = vsel %vm159, %v192, 0
    %211 = vmatpush.msra.mxu0 0.0
    %212 = vmatpush.msra.mxu0 0.0
    %213 = vmatpush.msra.mxu0 0.0
    %214 = vmatpush.msra.mxu0 0.0
    %215 = vmatpush.msra.mxu0 0.0
    %216 = vmatpush.msra.mxu0 0.0
    %217 = vmatpush.msra.mxu0 0.0
    %218 = vmatpush.msra.mxu0 0.0
    %219 = vmatpush.msra.mxu0 0.0
    %220 = vmatpush.msra.mxu0 0.0
    %221 = vmatpush.msra.mxu0 0.0
    %222 = vmatpush.msra.mxu0 0.0
    %223 = vmatpush.msra.mxu0 0.0
    %224 = vmatpush.msra.mxu0 0.0
    %225 = vmatpush.msra.mxu0 %v190
    %226 = vmatpush.msra.mxu0 %v189
    %227 = vmatmul.f32.gmra.mxu0 %v206
    %v228 = vpop.f32.mrf.mxu0
    %v229 = vadd.f32 %v198, %v228
    %230 = vmatmul.f32.gmra.mxu0 %v209
    %v231 = vpop.f32.mrf.mxu0
    %v232 = vadd.f32 %v203, %v231
    %233 = vdwg.mxu0
    %v234 = vtanh.pop %v229
    %v235 = vtanh.pop %v232
    %v236 = vld [vmem:[%s7] sm:$0x1]
    %v237 = vld [vmem:[#allocation2] sm:$0x1]
    %239 = vset.pattern.permute.xlu0 0
    %240 = vperm.xlu0 %239, %v237
    %v241 = vpop.permute.xlu0 %240
    %v243 = vperm.slane %v241, 0
    %v245 = vsel %vm159, %v236, 0
    %247 = vmatpush.msra.mxu0 0.0
    %248 = vmatpush.msra.mxu0 0.0
    %249 = vmatpush.msra.mxu0 0.0
    %250 = vmatpush.msra.mxu0 0.0
    %251 = vmatpush.msra.mxu0 0.0
    %252 = vmatpush.msra.mxu0 0.0
    %253 = vmatpush.msra.mxu0 0.0
    %254 = vmatpush.msra.mxu0 0.0
    %255 = vmatpush.msra.mxu0 0.0
    %256 = vmatpush.msra.mxu0 0.0
    %257 = vmatpush.msra.mxu0 0.0
    %258 = vmatpush.msra.mxu0 0.0
    %259 = vmatpush.msra.mxu0 0.0
    %260 = vmatpush.msra.mxu0 0.0
    %261 = vmatpush.msra.mxu0 %v235
    %262 = vmatpush.msra.mxu0 %v234
    %263 = vmatmul.f32.gmra.mxu0 %v245
    %v264 = vpop.f32.mrf.mxu0
    %v265 = vadd.f32 %v243, %v264
    %266 = vdwg.mxu0
    %267 = vst [vmem:[#allocation3] sm:$0x1] %v265
    // Predicated region
    $region38: #{tpu_custom_call.1} parent=1 // pred_check
      _
    $region39: #{tpu_custom_call.1} parent=1 // pred_check_branch
      %269 = sbr.rel (0) target = $region41
    $region40: #{tpu_custom_call.1} parent=1 // pred_region
      %271 = vsyncadd [#allocation4], 0
      %s273 = sshll.u32 [#allocation3], 4
      %s274 = int_to_ptr.vmem [resolvable:$true] %s273
      %s275 = sshll.u32 %s9, 4
      %s276 = int_to_ptr.hbm [resolvable:$true] %s275
      %278 = dma.vmem_to_hbm [thread:$0]  %s274, 16, %s276, [#allocation4]
    $region41: #{tpu_custom_call.1} parent=1 // pred_fallthru
      _
    // Predicated region
    $region42: #{tpu_custom_call.1} parent=1 // pred_check
      _
    $region43: #{tpu_custom_call.1} parent=1 // pred_check_branch
      %280 = sbr.rel (0) target = $region45
    $region44: #{tpu_custom_call.1} parent=1 // pred_region
      %282 = dma.done [#allocation4], 16
    $region45: #{tpu_custom_call.1} parent=1 // pred_fallthru
      _
    %283 = vsyncpa [#allocation4], 1

</llo_original>
